<compile_context>
chip_gen: v5e
topology: v5e:2x2
jax: 0.10.0
libtpu: 0.0.40
codegen_flags: <defaults>
</compile_context>

<pallas_src>
import math
from functools import partial

import jax
import jax.numpy as jnp
from jax.experimental import pallas as pl
from jax.experimental.pallas import tpu as pltpu


# ---------------------------------------------------------------------------
# Kernel body
# ---------------------------------------------------------------------------
def _roll_last(arr, shift, use_xlu_roll):
    """Circular roll along the last (lane) axis; static non-negative shift."""
    axis = arr.ndim - 1
    if use_xlu_roll:
        return pltpu.roll(arr, shift, axis)        # XLU slot (free-ish)
    return jnp.roll(arr, shift, axis=axis)         # slice+concat fallback (tiny L)


def _rotary_kernel(x_ref, cos_ref, sn_ref, o_ref, *, lanes, use_xlu_roll):
    x = x_ref[...]                                  # (TB, TR, L)
    cos = cos_ref[...]                              # (TR, L): cos at both pair lanes
    sn = sn_ref[...]                                # (TR, L): -sin at even lanes, 0 at odd
    # sp table derived in-kernel: sp[l] = sn[l-1]  (+sin at odd lanes after the
    # sign fold below, 0 at even lanes, 0 at the wraparound lane 0).
    sn_shift = _roll_last(sn, 1, use_xlu_roll)
    x_next = _roll_last(x, lanes - 1, use_xlu_roll)     # x[..., l+1] (circular)
    x_prev = _roll_last(x, 1, use_xlu_roll)             # x[..., l-1] (circular)
    # Wraparound lanes (0 and L-1) are multiplied by exact zeros baked into the
    # tables, so no masking is needed.  (Caveat: 0*Inf / 0*NaN -> NaN if x ever
    # carries non-finite padding at those lanes.)
    o_ref[...] = x * cos[None] + x_next * sn[None] - x_prev * sn_shift[None]


# ---------------------------------------------------------------------------
# Host-side tables (precompute once per (context, seq_len, head_dim, dtype))
# ---------------------------------------------------------------------------
def rotary_tables(context, seq_len, head_dim, dtype):
    """cos / signed-sin tables, each (seq_len, head_dim), computed in f32."""
    f32 = jnp.float32
    span = jnp.arange(0, head_dim, 2, dtype=f32)
    divisors = jnp.exp(-span * (math.log(context) / head_dim))       # (D//2,)
    positions = jnp.arange(seq_len, dtype=f32)[:, None]              # (S, 1)
    angles = positions * divisors                                    # (S, D//2)
    cos = jnp.cos(angles)
    sin = jnp.sin(angles)
    zeros = jnp.zeros_like(sin)
    cos_full = jnp.repeat(cos, 2, axis=-1)                           # (S, D)
    # sn multiplies roll(x, -1): only even lanes used -> -sin there, 0 at odd.
    sn_full = jnp.stack([-sin, zeros], axis=-1).reshape(seq_len, head_dim)
    return cos_full.astype(dtype), sn_full.astype(dtype)


# ---------------------------------------------------------------------------
# Layout / tiling selection
# ---------------------------------------------------------------------------
def _lane_dense_layout(seq_len, head_dim):
    """(R, L) view of the trailing (S, D) dims with a lane-dense last axis."""
    if head_dim % 128 == 0:
        return seq_len, head_dim
    if (seq_len * head_dim) % 128 == 0:
        return (seq_len * head_dim) // 128, 128
    # Tiny / test shapes: a block equal to the full array dims is still legal.
    return seq_len, head_dim


def _vmem_cap_bytes():
    try:
        return int(pltpu.get_tpu_info().vmem_capacity_bytes)
    except Exception:
        return 64 << 20            # most constrained generation (v7x per-TC)


def _choose_tiles(BH, R, L, itemsize, max_block_bytes, *, min_steps=8,
                  min_tile_bytes=512 * 1024):
    """Pick (TB, TR) for an x tile of (TB, TR, L).  TR is a mult. of 8 or == R."""
    row_bytes = L * itemsize
    slice_bytes = R * row_bytes
    if slice_bytes <= max_block_bytes:
        TR = R                                           # full dim -> always legal
    else:
        TR = min(R, max(8, (max_block_bytes // row_bytes) // 8 * 8))
    tile_r_bytes = TR * row_bytes
    TB = max(1, min(BH, max_block_bytes // max(tile_r_bytes, 1)))

    # Keep enough grid steps to hide the DMA prologue/epilogue, but never
    # shrink tiles below ~512 KiB (per-step overhead would dominate again).
    def steps(tb):
        return pl.cdiv(BH, tb) * pl.cdiv(R, TR)

    while TB > 1 and steps(TB) < min_steps and (TB // 2) * tile_r_bytes >= min_tile_bytes:
        TB //= 2
    return TB, TR


# ---------------------------------------------------------------------------
# Public wrapper
# ---------------------------------------------------------------------------
def rotary_forward(x, context, *, tables=None, max_block_bytes=4 * 1024 * 1024):
    B, H, S, D = x.shape
    assert D % 2 == 0, "head_dim must be even for rotary embeddings"
    if tables is None:
        # Callers should precompute once via rotary_tables() and pass them in.
        tables = rotary_tables(context, S, D, x.dtype)
    cos_full, sn_full = tables

    R, L = _lane_dense_layout(S, D)
    BH = B * H
    # TODO(synk): verify in the HLO that these reshapes are layout-free when
    # D < 128; if XLA inserts a relayout, prefer native (TB, S_tile, D) blocks
    # and accept masked partial stores instead.
    x2 = x.reshape(BH, R, L)
    cos2 = cos_full.reshape(R, L)
    sn2 = sn_full.reshape(R, L)

    itemsize = jnp.dtype(x.dtype).itemsize
    vmem_cap = _vmem_cap_bytes()
    hard_cap = max(16 << 20, (vmem_cap * 3) // 4)
    # Bound the tile request so 2x(x+out tiles) + tables always fit the cap.
    max_block_bytes = min(max_block_bytes, max(1, (hard_cap - (2 << 20)) // 5))

    TB, TR = _choose_tiles(BH, R, L, itemsize, max_block_bytes)
    grid = (pl.cdiv(R, TR), pl.cdiv(BH, TB))     # R outer -> table reuse across BH

    x_tile_bytes = TB * TR * L * itemsize
    tbl_tile_bytes = TR * L * itemsize
    # x + out double-buffered, two single-buffered tables, headroom; clamped.
    est = 4 * x_tile_bytes + 2 * tbl_tile_bytes + (2 << 20)
    vmem_limit = int(min(max(est, 16 << 20), hard_cap))

    use_xlu_roll = (L % 128 == 0)
    kernel = partial(_rotary_kernel, lanes=L, use_xlu_roll=use_xlu_roll)

    def _table_spec(index_map):
        # Constant across the inner BH axis -> single-buffer (halves table VMEM).
        try:
            return pl.BlockSpec((TR, L), index_map, pipeline_mode=pl.Buffered(1))
        except (TypeError, AttributeError):        # older jax w/o pipeline_mode
            return pl.BlockSpec((TR, L), index_map)

    out = pl.pallas_call(
        kernel,
        out_shape=jax.ShapeDtypeStruct((BH, R, L), x.dtype),
        grid_spec=pltpu.PrefetchScalarGridSpec(
            num_scalar_prefetch=0,
            grid=grid,
            in_specs=[
                pl.BlockSpec((TB, TR, L), lambda r, b: (b, r, 0)),
                _table_spec(lambda r, b: (r, 0)),
                _table_spec(lambda r, b: (r, 0)),
            ],
            out_specs=pl.BlockSpec((TB, TR, L), lambda r, b: (b, r, 0)),
        ),
        compiler_params=pltpu.CompilerParams(
            dimension_semantics=("parallel", "parallel"),
            vmem_limit_bytes=vmem_limit,
        ),
        # NOTE: input_output_aliases={0: 0} is valid here if the caller donates
        # x; left off by default so semantics are identical to the module.
    )(x2, cos2, sn2)
    return out.reshape(B, H, S, D)


# ---------------------------------------------------------------------------
# Pure-JAX reference (transcription of the PyTorch forward) for verification
# ---------------------------------------------------------------------------
def rotary_reference(x, context):
    B, H, S, D = x.shape
    f32 = jnp.float32
    span = jnp.arange(0, D, 2, dtype=f32)
    divisors = jnp.exp(-span * (math.log(context) / D))
    positions = jnp.arange(S, dtype=f32)[:, None]
    angles = positions * divisors
    cos = jnp.cos(angles)[None, None].astype(x.dtype)   # (1, 1, S, D//2)
    sin = jnp.sin(angles)[None, None].astype(x.dtype)
    xr = x.reshape(B, H, S, D // 2, 2)
    xe, xo = xr[..., 0], xr[..., 1]
    out = jnp.stack([xe * cos - xo * sin, xe * sin + xo * cos], axis=-1)
    return out.reshape(B, H, S, D)


if __name__ == "__main__":
    # Shapes implied by the module defaults: mod_dim=32, n_heads=4 -> head_dim=8.
    mod_dim, n_heads, context = 32, 4, 16
    head_dim = mod_dim // n_heads        # 8
    batch, seq = 2, 8                    # seq <= context

    key = jax.random.PRNGKey(0)
    x = jax.random.normal(key, (batch, n_heads, seq, head_dim), dtype=jnp.float32)

    tables = rotary_tables(context, seq, head_dim, x.dtype)   # hoisted / cacheable
    out = rotary_forward(x, context, tables=tables)
    jax.block_until_ready(out)
    ref = rotary_reference(x, context)
    assert out.shape == x.shape and out.dtype == x.dtype
    assert jnp.allclose(out, ref, atol=1e-5, rtol=1e-5)

    # Extra checks: lane-dense (L=128) path with XLU rolls, the (R-outer,
    # BH-inner) grid, forced R tiling, and a ragged last R block.
    extra_cases = [
        # (batch, heads, seq, head_dim, context, max_block_bytes)
        (2, 4, 128, 64, 4096, None),        # single large tile, pltpu.roll path
        (2, 4, 128, 64, 4096, 16 * 1024),   # forced (2, 8) grid, even division
        (2, 4, 96, 64, 4096, 16 * 1024),    # forced grid, ragged last R block
    ]
    for b2, h2, s2, d2, ctx2, mbb in extra_cases:
        x2 = jax.random.normal(jax.random.PRNGKey(0), (b2, h2, s2, d2), jnp.float32)
        kwargs = {} if mbb is None else {"max_block_bytes": mbb}
        o2 = rotary_forward(x2, ctx2, **kwargs)
        jax.block_until_ready(o2)
        r2 = rotary_reference(x2, ctx2)
        assert o2.shape == x2.shape and o2.dtype == x2.dtype
        assert jnp.allclose(o2, r2, atol=1e-5, rtol=1e-5), (b2, h2, s2, d2, mbb)

    print("KERNEL_OK")
</pallas_src>

<mosaic_0001>
module attributes {stable_mosaic.version = 11 : i64} {
  func.func @_rotary_kernel(%arg0: i32, %arg1: i32, %arg2: memref<8x8x8xf32, #tpu.memory_space<vmem>>, %arg3: memref<8x8xf32, #tpu.memory_space<vmem>>, %arg4: memref<8x8xf32, #tpu.memory_space<vmem>>, %arg5: memref<8x8x8xf32, #tpu.memory_space<vmem>>) attributes {dimension_semantics = [#tpu.dimension_semantics<parallel>, #tpu.dimension_semantics<parallel>], iteration_bounds = array<i64: 1, 1>, scalar_prefetch = 0 : i64, scratch_operands = 0 : i64, tpu.core_type = #tpu.core_type<tc>, window_params = [{transform_indices = @transform_0, window_bounds = array<i64: 8, 8, 8>}, {pipeline_mode = #tpu.pipeline_mode<synchronous>, transform_indices = @transform_1, window_bounds = array<i64: 8, 8>}, {pipeline_mode = #tpu.pipeline_mode<synchronous>, transform_indices = @transform_2, window_bounds = array<i64: 8, 8>}, {transform_indices = @transform_3, window_bounds = array<i64: 8, 8, 8>}]} {
    %c0 = arith.constant 0 : index
    %c0_0 = arith.constant 0 : index
    %c0_1 = arith.constant 0 : index
    %0 = vector.load %arg2[%c0, %c0_0, %c0_1] : memref<8x8x8xf32, #tpu.memory_space<vmem>>, vector<8x8x8xf32>
    %c0_2 = arith.constant 0 : index
    %c0_3 = arith.constant 0 : index
    %1 = vector.load %arg3[%c0_2, %c0_3] : memref<8x8xf32, #tpu.memory_space<vmem>>, vector<8x8xf32>
    %c0_4 = arith.constant 0 : index
    %c0_5 = arith.constant 0 : index
    %2 = vector.load %arg4[%c0_4, %c0_5] : memref<8x8xf32, #tpu.memory_space<vmem>>, vector<8x8xf32>
    %3 = vector.extract_strided_slice %2 {offsets = [0, 7], sizes = [8, 1], strides = [1, 1]} : vector<8x8xf32> to vector<8x1xf32>
    %4 = vector.extract_strided_slice %2 {offsets = [0, 0], sizes = [8, 7], strides = [1, 1]} : vector<8x8xf32> to vector<8x7xf32>
    %5 = tpu.concatenate %3, %4 in 1 : vector<8x1xf32>, vector<8x7xf32> -> vector<8x8xf32>
    %6 = vector.extract_strided_slice %0 {offsets = [0, 0, 1], sizes = [8, 8, 7], strides = [1, 1, 1]} : vector<8x8x8xf32> to vector<8x8x7xf32>
    %7 = vector.extract_strided_slice %0 {offsets = [0, 0, 0], sizes = [8, 8, 1], strides = [1, 1, 1]} : vector<8x8x8xf32> to vector<8x8x1xf32>
    %8 = tpu.concatenate %6, %7 in 2 : vector<8x8x7xf32>, vector<8x8x1xf32> -> vector<8x8x8xf32>
    %9 = vector.extract_strided_slice %0 {offsets = [0, 0, 7], sizes = [8, 8, 1], strides = [1, 1, 1]} : vector<8x8x8xf32> to vector<8x8x1xf32>
    %10 = vector.extract_strided_slice %0 {offsets = [0, 0, 0], sizes = [8, 8, 7], strides = [1, 1, 1]} : vector<8x8x8xf32> to vector<8x8x7xf32>
    %11 = tpu.concatenate %9, %10 in 2 : vector<8x8x1xf32>, vector<8x8x7xf32> -> vector<8x8x8xf32>
    %12 = vector.shape_cast %1 : vector<8x8xf32> to vector<1x8x8xf32>
    %13 = vector.broadcast %12 : vector<1x8x8xf32> to vector<8x8x8xf32>
    %14 = arith.mulf %0, %13 : vector<8x8x8xf32>
    %15 = vector.shape_cast %2 : vector<8x8xf32> to vector<1x8x8xf32>
    %16 = vector.broadcast %15 : vector<1x8x8xf32> to vector<8x8x8xf32>
    %17 = arith.mulf %8, %16 : vector<8x8x8xf32>
    %18 = arith.addf %14, %17 : vector<8x8x8xf32>
    %19 = vector.shape_cast %5 : vector<8x8xf32> to vector<1x8x8xf32>
    %20 = vector.broadcast %19 : vector<1x8x8xf32> to vector<8x8x8xf32>
    %21 = arith.mulf %11, %20 : vector<8x8x8xf32>
    %22 = arith.subf %18, %21 : vector<8x8x8xf32>
    %c0_6 = arith.constant 0 : index
    %c0_7 = arith.constant 0 : index
    %c0_8 = arith.constant 0 : index
    %23 = vector.load %arg5[%c0_6, %c0_7, %c0_8] : memref<8x8x8xf32, #tpu.memory_space<vmem>>, vector<8x8x8xf32>
    tpu.vector_store %arg5[%c0_6, %c0_7, %c0_8], %22 {strides = array<i32>} : memref<8x8x8xf32, #tpu.memory_space<vmem>>, vector<8x8x8xf32>,
    return
  }
  func.func @transform_0(%arg0: i32, %arg1: i32) -> (i32, i32, i32) {
    %c0_i32 = arith.constant 0 : i32
    %c0_i32_0 = arith.constant 0 : i32
    return %arg1, %arg0, %c0_i32 : i32, i32, i32
  }
  func.func @transform_1(%arg0: i32, %arg1: i32) -> (i32, i32) {
    %c0_i32 = arith.constant 0 : i32
    %c0_i32_0 = arith.constant 0 : i32
    return %arg0, %c0_i32 : i32, i32
  }
  func.func @transform_2(%arg0: i32, %arg1: i32) -> (i32, i32) {
    %c0_i32 = arith.constant 0 : i32
    %c0_i32_0 = arith.constant 0 : i32
    return %arg0, %c0_i32 : i32, i32
  }
  func.func @transform_3(%arg0: i32, %arg1: i32) -> (i32, i32, i32) {
    %c0_i32 = arith.constant 0 : i32
    %c0_i32_0 = arith.constant 0 : i32
    return %arg1, %arg0, %c0_i32 : i32, i32, i32
  }
}

</mosaic_0001>

<llo_original>
// kernel: tpu_custom_call.1
$region0: #{tpu_custom_call.1}
  #allocation0 [shape = 'u32[]', space=smem, size = 0x4, offset = 0x4, fixed_abs, tag = 'smem constant byte address 0x4 - core index']
  #allocation1 [shape = 'u32[72,128]{1,0:T(1,128)}', space=vmem, size = 0x9000, scoped, tag = 'internal scratch']
  %s0 = inlined_call_operand.hbm [shape: f32[8,8,8], index: 0, kind: input, shape index: {}]
  %s1 = inlined_call_operand.hbm [shape: f32[8,8], index: 1, kind: input, shape index: {}]
  %s2 = inlined_call_operand.hbm [shape: f32[8,8], index: 2, kind: input, shape index: {}]
  %s3 = inlined_call_operand.hbm [shape: f32[8,8,8], index: 3, kind: output, shape index: {}]
  %s4 = sld [smem:[#allocation0]]
  $region34: #{tpu_custom_call.1} parent=0
    _
  %s6 = ssub.s32 1, %s4
  %s7 = scalar_select 0, %s6, %s4
  $region1: #{tpu_custom_call.1} parent=0
    #allocation2 [shape = 'u8[32768]{0}', space=vmem, size = 0x8000, scoped, tag = 'input window, operand 0, single buffered']
    #allocation3 [shape = 's32[1]{0}', space=sflag, size = 0x4, scoped, tag = 'scoped memory for tpu_custom_call.1']
    #allocation4 [shape = 's32[1]{0}', space=sflag, size = 0x4, scoped, tag = 'scoped memory for tpu_custom_call.1']
    #allocation5 [shape = 'u8[4096]{0}', space=vmem, size = 0x1000, scoped, tag = 'input window, operand 1, single buffered']
    #allocation6 [shape = 's32[1]{0}', space=sflag, size = 0x4, scoped, tag = 'scoped memory for tpu_custom_call.1']
    #allocation7 [shape = 'u8[4096]{0}', space=vmem, size = 0x1000, scoped, tag = 'input window, operand 2, single buffered']
    #allocation8 [shape = 'u8[32768]{0}', space=vmem, size = 0x8000, scoped, tag = 'output window, operand 0, single buffered']
    %8 = vsyncpa [#allocation3], 0
    %9 = vsyncpa [#allocation6], 0
    %10 = vsyncpa [#allocation4], 0
    // Predicated region
    $region2: #{tpu_custom_call.1} parent=1 // pred_check
      _
    $region3: #{tpu_custom_call.1} parent=1 // pred_check_branch
      %12 = sbr.rel (0) target = $region5
    $region4: #{tpu_custom_call.1} parent=1 // pred_region
      %14 = vsyncadd [#allocation3], 0
      %s15 = sshll.u32 %s0, 4
      %s16 = int_to_ptr.hbm [resolvable:$true] %s15
      %s17 = sshll.u32 [#allocation2], 4
      %s18 = int_to_ptr.vmem [resolvable:$true] %s17
      %23 = dma.hbm_to_vmem [thread:$0]  %s16, 1024, %s18, [#allocation3], 128, 128, 8
    $region5: #{tpu_custom_call.1} parent=1 // pred_fallthru
      _
    // Predicated region
    $region6: #{tpu_custom_call.1} parent=1 // pred_check
      _
    $region7: #{tpu_custom_call.1} parent=1 // pred_check_branch
      %25 = sbr.rel (0) target = $region9
    $region8: #{tpu_custom_call.1} parent=1 // pred_region
      %27 = vsyncadd [#allocation6], 0
      %s29 = sshll.u32 %s1, 4
      %s30 = int_to_ptr.hbm [resolvable:$true] %s29
      %s31 = sshll.u32 [#allocation5], 4
      %s32 = int_to_ptr.vmem [resolvable:$true] %s31
      %34 = dma.hbm_to_vmem [thread:$0]  %s30, 128, %s32, [#allocation6]
    $region9: #{tpu_custom_call.1} parent=1 // pred_fallthru
      _
    // Predicated region
    $region10: #{tpu_custom_call.1} parent=1 // pred_check
      _
    $region11: #{tpu_custom_call.1} parent=1 // pred_check_branch
      %36 = sbr.rel (0) target = $region13
    $region12: #{tpu_custom_call.1} parent=1 // pred_region
      %38 = vsyncadd [#allocation6], 0
      %s40 = sshll.u32 %s2, 4
      %s41 = int_to_ptr.hbm [resolvable:$true] %s40
      %s42 = sshll.u32 [#allocation7], 4
      %s43 = int_to_ptr.vmem [resolvable:$true] %s42
      %45 = dma.hbm_to_vmem [thread:$0]  %s41, 128, %s43, [#allocation6]
    $region13: #{tpu_custom_call.1} parent=1 // pred_fallthru
      _
    // Predicated region
    $region14: #{tpu_custom_call.1} parent=1 // pred_check
      _
    $region15: #{tpu_custom_call.1} parent=1 // pred_check_branch
      %47 = sbr.rel (0) target = $region17
    $region16: #{tpu_custom_call.1} parent=1 // pred_region
      %49 = dma.done [#allocation3], 1024
    $region17: #{tpu_custom_call.1} parent=1 // pred_fallthru
      _
    // Predicated region
    $region18: #{tpu_custom_call.1} parent=1 // pred_check
      _
    $region19: #{tpu_custom_call.1} parent=1 // pred_check_branch
      %51 = sbr.rel (0) target = $region21
    $region20: #{tpu_custom_call.1} parent=1 // pred_region
      %53 = dma.done [#allocation6], 128
    $region21: #{tpu_custom_call.1} parent=1 // pred_fallthru
      _
    // Predicated region
    $region22: #{tpu_custom_call.1} parent=1 // pred_check
      _
    $region23: #{tpu_custom_call.1} parent=1 // pred_check_branch
      %55 = sbr.rel (0) target = $region25
    $region24: #{tpu_custom_call.1} parent=1 // pred_region
      %57 = dma.done [#allocation6], 128
    $region25: #{tpu_custom_call.1} parent=1 // pred_fallthru
      _
    %v58 = vld [vmem:[#allocation2] sm:$0xff]
    %v59 = vld [vmem:[#allocation2 + $0x8] sm:$0xff]
    %v60 = vld [vmem:[#allocation2 + $0x10] sm:$0xff]
    %v61 = vld [vmem:[#allocation2 + $0x18] sm:$0xff]
    %v62 = vld [vmem:[#allocation2 + $0x20] sm:$0xff]
    %v63 = vld [vmem:[#allocation2 + $0x28] sm:$0xff]
    %v64 = vld [vmem:[#allocation2 + $0x30] sm:$0xff]
    %v65 = vld [vmem:[#allocation2 + $0x38] sm:$0xff]
    %v66 = vld [vmem:[#allocation5] sm:$0xff]
    %v67 = vld [vmem:[#allocation7] sm:$0xff]
    %69 = vrot.lane.b32.xlu0 %v67, 121
    %v70 = vpop.permute.xlu0 %69
    %72 = vrot.lane.b32.xlu0 %v67, 1
    %v73 = vpop.permute.xlu0 %72
    %vm75 = vcmask 7168
    %v76 = vsel %vm75, %v70, %v73
    %85 = vrot.lane.b32.xlu0 %v58, 127
    %v86 = vpop.permute.xlu0 %85
    %87 = vrot.lane.b32.xlu0 %v59, 127
    %v88 = vpop.permute.xlu0 %87
    %89 = vrot.lane.b32.xlu0 %v60, 127
    %v90 = vpop.permute.xlu0 %89
    %91 = vrot.lane.b32.xlu0 %v61, 127
    %v92 = vpop.permute.xlu0 %91
    %93 = vrot.lane.b32.xlu0 %v62, 127
    %v94 = vpop.permute.xlu0 %93
    %95 = vrot.lane.b32.xlu0 %v63, 127
    %v96 = vpop.permute.xlu0 %95
    %97 = vrot.lane.b32.xlu0 %v64, 127
    %v98 = vpop.permute.xlu0 %97
    %99 = vrot.lane.b32.xlu0 %v65, 127
    %v100 = vpop.permute.xlu0 %99
    %109 = vrot.lane.b32.xlu0 %v58, 7
    %v110 = vpop.permute.xlu0 %109
    %111 = vrot.lane.b32.xlu0 %v59, 7
    %v112 = vpop.permute.xlu0 %111
    %113 = vrot.lane.b32.xlu0 %v60, 7
    %v114 = vpop.permute.xlu0 %113
    %115 = vrot.lane.b32.xlu0 %v61, 7
    %v116 = vpop.permute.xlu0 %115
    %117 = vrot.lane.b32.xlu0 %v62, 7
    %v118 = vpop.permute.xlu0 %117
    %119 = vrot.lane.b32.xlu0 %v63, 7
    %v120 = vpop.permute.xlu0 %119
    %121 = vrot.lane.b32.xlu0 %v64, 7
    %v122 = vpop.permute.xlu0 %121
    %123 = vrot.lane.b32.xlu0 %v65, 7
    %v124 = vpop.permute.xlu0 %123
    %vm133 = vcmask 56320
    %v134 = vsel %vm133, %v86, %v110
    %v135 = vsel %vm133, %v88, %v112
    %v136 = vsel %vm133, %v90, %v114
    %v137 = vsel %vm133, %v92, %v116
    %v138 = vsel %vm133, %v94, %v118
    %v139 = vsel %vm133, %v96, %v120
    %v140 = vsel %vm133, %v98, %v122
    %v141 = vsel %vm133, %v100, %v124
    %142 = vrot.lane.b32.xlu0 %v58, 121
    %v143 = vpop.permute.xlu0 %142
    %144 = vrot.lane.b32.xlu0 %v59, 121
    %v145 = vpop.permute.xlu0 %144
    %146 = vrot.lane.b32.xlu0 %v60, 121
    %v147 = vpop.permute.xlu0 %146
    %148 = vrot.lane.b32.xlu0 %v61, 121
    %v149 = vpop.permute.xlu0 %148
    %150 = vrot.lane.b32.xlu0 %v62, 121
    %v151 = vpop.permute.xlu0 %150
    %152 = vrot.lane.b32.xlu0 %v63, 121
    %v153 = vpop.permute.xlu0 %152
    %154 = vrot.lane.b32.xlu0 %v64, 121
    %v155 = vpop.permute.xlu0 %154
    %156 = vrot.lane.b32.xlu0 %v65, 121
    %v157 = vpop.permute.xlu0 %156
    %166 = vrot.lane.b32.xlu0 %v58, 1
    %v167 = vpop.permute.xlu0 %166
    %168 = vrot.lane.b32.xlu0 %v59, 1
    %v169 = vpop.permute.xlu0 %168
    %170 = vrot.lane.b32.xlu0 %v60, 1
    %v171 = vpop.permute.xlu0 %170
    %172 = vrot.lane.b32.xlu0 %v61, 1
    %v173 = vpop.permute.xlu0 %172
    %174 = vrot.lane.b32.xlu0 %v62, 1
    %v175 = vpop.permute.xlu0 %174
    %176 = vrot.lane.b32.xlu0 %v63, 1
    %v177 = vpop.permute.xlu0 %176
    %178 = vrot.lane.b32.xlu0 %v64, 1
    %v179 = vpop.permute.xlu0 %178
    %180 = vrot.lane.b32.xlu0 %v65, 1
    %v181 = vpop.permute.xlu0 %180
    %v190 = vsel %vm75, %v143, %v167
    %v191 = vsel %vm75, %v145, %v169
    %v192 = vsel %vm75, %v147, %v171
    %v193 = vsel %vm75, %v149, %v173
    %v194 = vsel %vm75, %v151, %v175
    %v195 = vsel %vm75, %v153, %v177
    %v196 = vsel %vm75, %v155, %v179
    %v197 = vsel %vm75, %v157, %v181
    %v198 = vmul.f32 %v58, %v66
    %v199 = vmul.f32 %v59, %v66
    %v200 = vmul.f32 %v60, %v66
    %v201 = vmul.f32 %v61, %v66
    %v202 = vmul.f32 %v62, %v66
    %v203 = vmul.f32 %v63, %v66
    %v204 = vmul.f32 %v64, %v66
    %v205 = vmul.f32 %v65, %v66
    %v206 = vmul.f32 %v134, %v67
    %v207 = vmul.f32 %v135, %v67
    %v208 = vmul.f32 %v136, %v67
    %v209 = vmul.f32 %v137, %v67
    %v210 = vmul.f32 %v138, %v67
    %v211 = vmul.f32 %v139, %v67
    %v212 = vmul.f32 %v140, %v67
    %v213 = vmul.f32 %v141, %v67
    %v214 = vadd.f32 %v198, %v206
    %v215 = vadd.f32 %v199, %v207
    %v216 = vadd.f32 %v200, %v208
    %v217 = vadd.f32 %v201, %v209
    %v218 = vadd.f32 %v202, %v210
    %v219 = vadd.f32 %v203, %v211
    %v220 = vadd.f32 %v204, %v212
    %v221 = vadd.f32 %v205, %v213
    %v222 = vmul.f32 %v190, %v76
    %v223 = vmul.f32 %v191, %v76
    %v224 = vmul.f32 %v192, %v76
    %v225 = vmul.f32 %v193, %v76
    %v226 = vmul.f32 %v194, %v76
    %v227 = vmul.f32 %v195, %v76
    %v228 = vmul.f32 %v196, %v76
    %v229 = vmul.f32 %v197, %v76
    %v230 = vsub.f32 %v214, %v222
    %v231 = vsub.f32 %v215, %v223
    %v232 = vsub.f32 %v216, %v224
    %v233 = vsub.f32 %v217, %v225
    %v234 = vsub.f32 %v218, %v226
    %v235 = vsub.f32 %v219, %v227
    %v236 = vsub.f32 %v220, %v228
    %v237 = vsub.f32 %v221, %v229
    %vm238 = vcmask 64512
    %239 = vst.msk [vmem:[#allocation8] sm:$0xff] %vm238, %v230
    %240 = vst.msk [vmem:[#allocation8 + $0x8] sm:$0xff] %vm238, %v231
    %241 = vst.msk [vmem:[#allocation8 + $0x10] sm:$0xff] %vm238, %v232
    %242 = vst.msk [vmem:[#allocation8 + $0x18] sm:$0xff] %vm238, %v233
    %243 = vst.msk [vmem:[#allocation8 + $0x20] sm:$0xff] %vm238, %v234
    %244 = vst.msk [vmem:[#allocation8 + $0x28] sm:$0xff] %vm238, %v235
    %245 = vst.msk [vmem:[#allocation8 + $0x30] sm:$0xff] %vm238, %v236
    %246 = vst.msk [vmem:[#allocation8 + $0x38] sm:$0xff] %vm238, %v237
    // Predicated region
    $region26: #{tpu_custom_call.1} parent=1 // pred_check
      _
    $region27: #{tpu_custom_call.1} parent=1 // pred_check_branch
      %248 = sbr.rel (0) target = $region29
    $region28: #{tpu_custom_call.1} parent=1 // pred_region
      %250 = vsyncadd [#allocation4], 0
      %s251 = sshll.u32 [#allocation8], 4
      %s252 = int_to_ptr.vmem [resolvable:$true] %s251
      %s253 = sshll.u32 %s3, 4
      %s254 = int_to_ptr.hbm [resolvable:$true] %s253
      %259 = dma.vmem_to_hbm [thread:$0]  %s252, 1024, %s254, [#allocation4], 128, 128, 8
    $region29: #{tpu_custom_call.1} parent=1 // pred_fallthru
      _
    // Predicated region
    $region30: #{tpu_custom_call.1} parent=1 // pred_check
      _
    $region31: #{tpu_custom_call.1} parent=1 // pred_check_branch
      %261 = sbr.rel (0) target = $region33
    $region32: #{tpu_custom_call.1} parent=1 // pred_region
      %263 = dma.done [#allocation4], 1024
    $region33: #{tpu_custom_call.1} parent=1 // pred_fallthru
      _
    %264 = vsyncpa [#allocation3], 1
    %265 = vsyncpa [#allocation6], 1
    %266 = vsyncpa [#allocation4], 1

</llo_original>
